<compile_context>
chip_gen: v6e
topology: v6e:2x2x1
jax: 0.10.0
libtpu: 0.0.40
codegen_flags: <defaults>
</compile_context>

<pallas_src>
import jax
import jax.numpy as jnp
from jax.experimental import pallas as pl
from jax.experimental.pallas import tpu as pltpu


def _series_decomp_kernel(w_ref, x_ref, trend_ref, season_ref):
    x = x_ref[...]                                   # (L, TN) column tile
    w = w_ref[...]                                   # (L, L) banded 1/k weights
    # Moving average as a banded matmul on the MXU, f32 accumulation.
    trend = jnp.dot(
        w, x,
        preferred_element_type=jnp.float32,
        precision=jax.lax.Precision.HIGHEST,
    )
    season = x.astype(jnp.float32) - trend           # VPU, hidden under MXU/DMA
    trend_ref[...] = trend.astype(trend_ref.dtype)
    season_ref[...] = season.astype(season_ref.dtype)


def series_decomp(x, kernel_size):
    """x: (B, L, C).  Returns (trend, season), both (B, L, C)."""
    assert kernel_size % 2 == 1, "kernel_size must be odd to preserve sequence length"
    B, L, C = x.shape
    pad = (kernel_size - 1) // 2

    # Banded moving-average weight matrix (bf16 for bf16 inputs -> native
    # bf16 MXU matmul with f32 accumulate; f32 otherwise).
    w_dtype = jnp.bfloat16 if x.dtype == jnp.bfloat16 else jnp.float32
    idx = jnp.arange(L, dtype=jnp.int32)
    band = jnp.abs(idx[:, None] - idx[None, :]) <= pad
    w = jnp.where(band,
                  jnp.asarray(1.0 / kernel_size, w_dtype),
                  jnp.asarray(0.0, w_dtype))

    # Lane-dense layout: fold batch into the channel axis -> (L, B*C),
    # padded to a multiple of 128 lanes (padding columns are independent and
    # are dropped on the way back).
    N = B * C
    x2 = jnp.transpose(x, (1, 0, 2)).reshape(L, N)
    LANE = 128
    n_pad = ((N + LANE - 1) // LANE) * LANE
    if n_pad != N:
        x2 = jnp.pad(x2, ((0, 0), (0, n_pad - N)))

    # Column tile: multiple of 128 that divides n_pad, capped so an f32 block
    # stays around <= 2 MiB (1 input + 2 outputs, double-buffered, plus the
    # resident (L, L) weights all fit default scoped VMEM on v5e/v6e/v7x).
    tn = 512
    while tn > LANE and (n_pad % tn != 0 or L * tn * 4 > 2 * 1024 * 1024):
        tn //= 2
    grid = (n_pad // tn,)

    # TODO(synk): for very large L (>~2048) the (L, L) band matrix no longer
    # fits VMEM; switch to a prefix-sum (cumsum difference) formulation there.

    trend2, season2 = pl.pallas_call(
        _series_decomp_kernel,
        out_shape=(
            jax.ShapeDtypeStruct((L, n_pad), x.dtype),
            jax.ShapeDtypeStruct((L, n_pad), x.dtype),
        ),
        grid=grid,
        in_specs=[
            pl.BlockSpec((L, L), lambda n: (0, 0)),   # grid-invariant weights
            pl.BlockSpec((L, tn), lambda n: (0, n)),
        ],
        out_specs=(
            pl.BlockSpec((L, tn), lambda n: (0, n)),
            pl.BlockSpec((L, tn), lambda n: (0, n)),
        ),
        compiler_params=pltpu.CompilerParams(
            dimension_semantics=("parallel",),
        ),
    )(w, x2)

    def unfold(y2):
        return jnp.transpose(y2[:, :N].reshape(L, B, C), (1, 0, 2))

    return unfold(trend2), unfold(season2)


def _reference(x, kernel_size):
    # Pure-JAX reference replicating AvgPool1d(stride=1, pad=(k-1)//2,
    # count_include_pad=True).
    pad = (kernel_size - 1) // 2
    xp = jnp.pad(x, ((0, 0), (pad, pad), (0, 0)))
    L = x.shape[1]
    trend = sum(xp[:, j:j + L, :] for j in range(kernel_size)) / kernel_size
    return trend.astype(x.dtype), (x - trend).astype(x.dtype)


if __name__ == "__main__":
    key = jax.random.PRNGKey(0)

    # (B, L, C, kernel_size): a tiny case matching the module's typical use,
    # plus a wider case that exercises a multi-step grid (B*C > 128).
    cases = [(2, 16, 8, 5), (4, 24, 160, 7)]
    for (B, L, C, k) in cases:
        key, sub = jax.random.split(key)
        x = jax.random.normal(sub, (B, L, C), dtype=jnp.float32)

        trend, season = series_decomp(x, k)
        jax.block_until_ready((trend, season))

        ref_trend, ref_season = _reference(x, k)
        assert jnp.allclose(trend, ref_trend, atol=1e-5, rtol=1e-5), (B, L, C, k)
        assert jnp.allclose(season, ref_season, atol=1e-5, rtol=1e-5), (B, L, C, k)

    print("KERNEL_OK")
</pallas_src>

<mosaic_0001>
module attributes {stable_mosaic.version = 11 : i64} {
  func.func @_series_decomp_kernel(%arg0: i32, %arg1: memref<16x16xf32, #tpu.memory_space<vmem>>, %arg2: memref<16x128xf32, #tpu.memory_space<vmem>>, %arg3: memref<16x128xf32, #tpu.memory_space<vmem>>, %arg4: memref<16x128xf32, #tpu.memory_space<vmem>>) attributes {dimension_semantics = [#tpu.dimension_semantics<parallel>], iteration_bounds = array<i64: 1>, scalar_prefetch = 0 : i64, scratch_operands = 0 : i64, tpu.core_type = #tpu.core_type<tc>, window_params = [{pipeline_mode = #tpu.pipeline_mode<synchronous>, transform_indices = @transform_0, window_bounds = array<i64: 16, 16>}, {transform_indices = @transform_1, window_bounds = array<i64: 16, 128>}, {transform_indices = @transform_2, window_bounds = array<i64: 16, 128>}, {transform_indices = @transform_3, window_bounds = array<i64: 16, 128>}]} {
    %c0 = arith.constant 0 : index
    %c0_0 = arith.constant 0 : index
    %0 = vector.load %arg2[%c0, %c0_0] : memref<16x128xf32, #tpu.memory_space<vmem>>, vector<16x128xf32>
    %c0_1 = arith.constant 0 : index
    %c0_2 = arith.constant 0 : index
    %1 = vector.load %arg1[%c0_1, %c0_2] : memref<16x16xf32, #tpu.memory_space<vmem>>, vector<16x16xf32>
    %cst = arith.constant dense<0.000000e+00> : vector<16x128xf32>
    %2 = tpu.matmul %1, %0, %cst {dimension_numbers = #tpu.dot_dimension_numbers<[1], [0], [0], [1], [0, 0, 1, 1], [], []>, precision = #tpu.contract_precision<fp32>} : vector<16x16xf32>, vector<16x128xf32>, vector<16x128xf32> -> vector<16x128xf32>
    %3 = arith.subf %0, %2 : vector<16x128xf32>
    %c0_3 = arith.constant 0 : index
    %c0_4 = arith.constant 0 : index
    %4 = vector.load %arg3[%c0_3, %c0_4] : memref<16x128xf32, #tpu.memory_space<vmem>>, vector<16x128xf32>
    tpu.vector_store %arg3[%c0_3, %c0_4], %2 {strides = array<i32>} : memref<16x128xf32, #tpu.memory_space<vmem>>, vector<16x128xf32>,
    %c0_5 = arith.constant 0 : index
    %c0_6 = arith.constant 0 : index
    %5 = vector.load %arg4[%c0_5, %c0_6] : memref<16x128xf32, #tpu.memory_space<vmem>>, vector<16x128xf32>
    tpu.vector_store %arg4[%c0_5, %c0_6], %3 {strides = array<i32>} : memref<16x128xf32, #tpu.memory_space<vmem>>, vector<16x128xf32>,
    return
  }
  func.func @transform_0(%arg0: i32) -> (i32, i32) {
    %c0_i32 = arith.constant 0 : i32
    %c0_i32_0 = arith.constant 0 : i32
    %c0_i32_1 = arith.constant 0 : i32
    return %c0_i32, %c0_i32_0 : i32, i32
  }
  func.func @transform_1(%arg0: i32) -> (i32, i32) {
    %c0_i32 = arith.constant 0 : i32
    %c0_i32_0 = arith.constant 0 : i32
    return %c0_i32, %arg0 : i32, i32
  }
  func.func @transform_2(%arg0: i32) -> (i32, i32) {
    %c0_i32 = arith.constant 0 : i32
    %c0_i32_0 = arith.constant 0 : i32
    return %c0_i32, %arg0 : i32, i32
  }
  func.func @transform_3(%arg0: i32) -> (i32, i32) {
    %c0_i32 = arith.constant 0 : i32
    %c0_i32_0 = arith.constant 0 : i32
    return %c0_i32, %arg0 : i32, i32
  }
}

</mosaic_0001>

<llo_original>
// kernel: tpu_custom_call.1
$region0: #{tpu_custom_call.1}
  #allocation0 [shape = 'u32[]', space=smem, size = 0x4, offset = 0x4, fixed_abs, tag = 'smem constant byte address 0x4 - core index']
  #allocation1 [shape = 'u32[144,128]{1,0:T(1,128)}', space=vmem, size = 0x12000, scoped, tag = 'internal scratch']
  %s0 = inlined_call_operand.hbm [shape: f32[16,16], index: 0, kind: input, shape index: {}]
  %s1 = inlined_call_operand.hbm [shape: f32[16,128], index: 1, kind: input, shape index: {}]
  %s2 = inlined_call_operand.hbm [shape: f32[16,128], index: 2, kind: output, shape index: {0}]
  %s3 = inlined_call_operand.hbm [shape: f32[16,128], index: 3, kind: output, shape index: {1}]
  %4 = xla_tuple %s2, %s3
  %s5 = sld [smem:[#allocation0]]
  $region34: #{tpu_custom_call.1} parent=0
    _
  %s7 = ssub.s32 1, %s5
  %s8 = scalar_select 0, %s7, %s5
  $region1: #{tpu_custom_call.1} parent=0
    #allocation2 [shape = 'u8[8192]{0}', space=vmem, size = 0x2000, scoped, tag = 'input window, operand 0, single buffered']
    #allocation3 [shape = 's32[1]{0}', space=sflag, size = 0x4, scoped, tag = 'scoped memory for tpu_custom_call.1']
    #allocation4 [shape = 's32[1]{0}', space=sflag, size = 0x4, scoped, tag = 'scoped memory for tpu_custom_call.1']
    #allocation5 [shape = 'u8[8192]{0}', space=vmem, size = 0x2000, scoped, tag = 'input window, operand 1, single buffered']
    #allocation6 [shape = 's32[1]{0}', space=sflag, size = 0x4, scoped, tag = 'scoped memory for tpu_custom_call.1']
    #allocation7 [shape = 'u8[8192]{0}', space=vmem, size = 0x2000, scoped, tag = 'output window, operand 0, single buffered']
    #allocation8 [shape = 'u8[8192]{0}', space=vmem, size = 0x2000, scoped, tag = 'output window, operand 1, single buffered']
    #allocation9 [shape = 's32[1]{0}', space=sflag, size = 0x4, scoped, tag = 'scoped memory for tpu_custom_call.1']
    %9 = vsyncpa [#allocation3], 0
    %10 = vsyncpa [#allocation6], 0
    %11 = vsyncpa [#allocation4], 0
    %12 = vsyncpa [#allocation9], 0
    // Predicated region
    $region2: #{tpu_custom_call.1} parent=1 // pred_check
      _
    $region3: #{tpu_custom_call.1} parent=1 // pred_check_branch
      %14 = sbr.rel (0) target = $region5
    $region4: #{tpu_custom_call.1} parent=1 // pred_region
      %s16 = ssub.s32 256, 256
      %17 = vsyncadd [#allocation3], %s16
      %s18 = sshll.u32 [#allocation2], 4
      %s19 = int_to_ptr.vmem [resolvable:$true] %s18
      %24 = dma.hbm_to_vmem [thread:$0]  %s0, 256, %s19, [#allocation3], 128, 128, 8
    $region5: #{tpu_custom_call.1} parent=1 // pred_fallthru
      _
    // Predicated region
    $region6: #{tpu_custom_call.1} parent=1 // pred_check
      _
    $region7: #{tpu_custom_call.1} parent=1 // pred_check_branch
      %26 = sbr.rel (0) target = $region9
    $region8: #{tpu_custom_call.1} parent=1 // pred_region
      %s28 = ssub.s32 256, 256
      %29 = vsyncadd [#allocation6], %s28
      %s30 = sshll.u32 [#allocation5], 4
      %s31 = int_to_ptr.vmem [resolvable:$true] %s30
      %36 = dma.hbm_to_vmem [thread:$0]  %s1, 256, %s31, [#allocation6], 128, 128, 8
    $region9: #{tpu_custom_call.1} parent=1 // pred_fallthru
      _
    // Predicated region
    $region10: #{tpu_custom_call.1} parent=1 // pred_check
      _
    $region11: #{tpu_custom_call.1} parent=1 // pred_check_branch
      %38 = sbr.rel (0) target = $region13
    $region12: #{tpu_custom_call.1} parent=1 // pred_region
      %39 = dma.done [#allocation3], 256
    $region13: #{tpu_custom_call.1} parent=1 // pred_fallthru
      _
    // Predicated region
    $region14: #{tpu_custom_call.1} parent=1 // pred_check
      _
    $region15: #{tpu_custom_call.1} parent=1 // pred_check_branch
      %41 = sbr.rel (0) target = $region17
    $region16: #{tpu_custom_call.1} parent=1 // pred_region
      %42 = dma.done [#allocation6], 256
    $region17: #{tpu_custom_call.1} parent=1 // pred_fallthru
      _
    %v43 = vld [vmem:[#allocation5] sm:$0xff]
    %v44 = vld [vmem:[#allocation5 + $0x8] sm:$0xff]
    %v45 = vld [vmem:[#allocation2] sm:$0xff]
    %v46 = vld [vmem:[#allocation2 + $0x8] sm:$0xff]
    %vm47 = vcmask 130048
    %v49 = vsel %vm47, %v45, 0
    %v52 = vsel %vm47, %v46, 0
    %54 = vmatprep.subr.mxu0 0.0
    %55 = vmatpush1.msra.mxu0 0.0
    %56 = vmatprep.subr.mxu0 0.0
    %57 = vmatpush1.msra.mxu0 0.0
    %58 = vmatprep.subr.mxu0 0.0
    %59 = vmatpush1.msra.mxu0 0.0
    %60 = vmatprep.subr.mxu0 0.0
    %61 = vmatpush1.msra.mxu0 0.0
    %62 = vmatprep.subr.mxu0 0.0
    %63 = vmatpush1.msra.mxu0 0.0
    %64 = vmatprep.subr.mxu0 0.0
    %65 = vmatpush1.msra.mxu0 0.0
    %66 = vmatprep.subr.mxu0 0.0
    %67 = vmatpush1.msra.mxu0 0.0
    %68 = vmatprep.subr.mxu0 0.0
    %69 = vmatpush1.msra.mxu0 0.0
    %70 = vmatprep.subr.mxu0 0.0
    %71 = vmatpush1.msra.mxu0 0.0
    %72 = vmatprep.subr.mxu0 0.0
    %73 = vmatpush1.msra.mxu0 0.0
    %74 = vmatprep.subr.mxu0 0.0
    %75 = vmatpush1.msra.mxu0 0.0
    %76 = vmatprep.subr.mxu0 0.0
    %77 = vmatpush1.msra.mxu0 0.0
    %78 = vmatprep.subr.mxu0 0.0
    %79 = vmatpush1.msra.mxu0 0.0
    %80 = vmatprep.subr.mxu0 0.0
    %81 = vmatpush1.msra.mxu0 0.0
    %82 = vmatprep.subr.mxu0 0.0
    %v83 = vand.u32 %v44, 4294901760
    %84 = vmatpush1.msra.mxu0 %v83
    %85 = vmatprep.subr.mxu0 0.0
    %v86 = vand.u32 %v43, 4294901760
    %87 = vmatpush1.msra.mxu0 %v86
    %88 = vmatprep.subr.mxu0 0.0
    %89 = vmatpush2.msra.mxu0 0.0
    %90 = vmatprep.subr.mxu0 0.0
    %91 = vmatpush2.msra.mxu0 0.0
    %92 = vmatprep.subr.mxu0 0.0
    %93 = vmatpush2.msra.mxu0 0.0
    %94 = vmatprep.subr.mxu0 0.0
    %95 = vmatpush2.msra.mxu0 0.0
    %96 = vmatprep.subr.mxu0 0.0
    %97 = vmatpush2.msra.mxu0 0.0
    %98 = vmatprep.subr.mxu0 0.0
    %99 = vmatpush2.msra.mxu0 0.0
    %100 = vmatprep.subr.mxu0 0.0
    %101 = vmatpush2.msra.mxu0 0.0
    %102 = vmatprep.subr.mxu0 0.0
    %103 = vmatpush2.msra.mxu0 0.0
    %104 = vmatprep.subr.mxu0 0.0
    %105 = vmatpush2.msra.mxu0 0.0
    %106 = vmatprep.subr.mxu0 0.0
    %107 = vmatpush2.msra.mxu0 0.0
    %108 = vmatprep.subr.mxu0 0.0
    %109 = vmatpush2.msra.mxu0 0.0
    %110 = vmatprep.subr.mxu0 0.0
    %111 = vmatpush2.msra.mxu0 0.0
    %112 = vmatprep.subr.mxu0 0.0
    %113 = vmatpush2.msra.mxu0 0.0
    %114 = vmatprep.subr.mxu0 0.0
    %115 = vmatpush2.msra.mxu0 0.0
    %116 = vmatprep.subr.mxu0 0.0
    %117 = vmatpush2.msra.mxu0 0.0
    %118 = vmatprep.subr.mxu0 0.0
    %119 = vmatpush2.msra.mxu0 0.0
    %120 = vmatprep.mubr.f32.mxu0 0.0
    %v121 = vand.u32 %v49, 4294901760
    %v122 = vsub.f32 %v49, %v121
    %v123 = vand.u32 %v122, 4294901760
    %v124 = vsub.f32 %v122, %v123
    %v125 = vand.u32 %v124, 4294901760
    %126 = vmatmul.mubr.f32.gmra.mxu0 %v125
    %v127 = vpop.f32.mrf.mxu0
    %v128 = vadd.f32 0.0, %v127
    %v129 = vpop.f32.mrf.mxu0
    %130 = vmatprep.mubr.f32.mxu0 0.0
    %v131 = vand.u32 %v52, 4294901760
    %v132 = vsub.f32 %v52, %v131
    %v133 = vand.u32 %v132, 4294901760
    %v134 = vsub.f32 %v132, %v133
    %v135 = vand.u32 %v134, 4294901760
    %136 = vmatmul.mubr.f32.gmra.mxu0 %v135
    %v137 = vpop.f32.mrf.mxu0
    %v138 = vadd.f32 0.0, %v137
    %v139 = vpop.f32.mrf.mxu0
    %140 = vdwg.mxu0
    %141 = vmatprep.subr.mxu0 0.0
    %142 = vmatpush1.msra.mxu0 0.0
    %143 = vmatprep.subr.mxu0 0.0
    %144 = vmatpush1.msra.mxu0 0.0
    %145 = vmatprep.subr.mxu0 0.0
    %146 = vmatpush1.msra.mxu0 0.0
    %147 = vmatprep.subr.mxu0 0.0
    %148 = vmatpush1.msra.mxu0 0.0
    %149 = vmatprep.subr.mxu0 0.0
    %150 = vmatpush1.msra.mxu0 0.0
    %151 = vmatprep.subr.mxu0 0.0
    %152 = vmatpush1.msra.mxu0 0.0
    %153 = vmatprep.subr.mxu0 0.0
    %154 = vmatpush1.msra.mxu0 0.0
    %155 = vmatprep.subr.mxu0 0.0
    %156 = vmatpush1.msra.mxu0 0.0
    %157 = vmatprep.subr.mxu0 0.0
    %158 = vmatpush1.msra.mxu0 0.0
    %159 = vmatprep.subr.mxu0 0.0
    %160 = vmatpush1.msra.mxu0 0.0
    %161 = vmatprep.subr.mxu0 0.0
    %162 = vmatpush1.msra.mxu0 0.0
    %163 = vmatprep.subr.mxu0 0.0
    %164 = vmatpush1.msra.mxu0 0.0
    %165 = vmatprep.subr.mxu0 0.0
    %166 = vmatpush1.msra.mxu0 0.0
    %167 = vmatprep.subr.mxu0 0.0
    %168 = vmatpush1.msra.mxu0 0.0
    %169 = vmatprep.subr.mxu0 0.0
    %v170 = vand.u32 %v44, 4294901760
    %v171 = vsub.f32 %v44, %v170
    %v172 = vand.u32 %v171, 4294901760
    %v173 = vsub.f32 %v171, %v172
    %v174 = vand.u32 %v173, 4294901760
    %175 = vmatpush1.msra.mxu0 %v174
    %176 = vmatprep.subr.mxu0 0.0
    %v177 = vand.u32 %v43, 4294901760
    %v178 = vsub.f32 %v43, %v177
    %v179 = vand.u32 %v178, 4294901760
    %v180 = vsub.f32 %v178, %v179
    %v181 = vand.u32 %v180, 4294901760
    %182 = vmatpush1.msra.mxu0 %v181
    %183 = vmatprep.subr.mxu0 0.0
    %184 = vmatpush2.msra.mxu0 0.0
    %185 = vmatprep.subr.mxu0 0.0
    %186 = vmatpush2.msra.mxu0 0.0
    %187 = vmatprep.subr.mxu0 0.0
    %188 = vmatpush2.msra.mxu0 0.0
    %189 = vmatprep.subr.mxu0 0.0
    %190 = vmatpush2.msra.mxu0 0.0
    %191 = vmatprep.subr.mxu0 0.0
    %192 = vmatpush2.msra.mxu0 0.0
    %193 = vmatprep.subr.mxu0 0.0
    %194 = vmatpush2.msra.mxu0 0.0
    %195 = vmatprep.subr.mxu0 0.0
    %196 = vmatpush2.msra.mxu0 0.0
    %197 = vmatprep.subr.mxu0 0.0
    %198 = vmatpush2.msra.mxu0 0.0
    %199 = vmatprep.subr.mxu0 0.0
    %200 = vmatpush2.msra.mxu0 0.0
    %201 = vmatprep.subr.mxu0 0.0
    %202 = vmatpush2.msra.mxu0 0.0
    %203 = vmatprep.subr.mxu0 0.0
    %204 = vmatpush2.msra.mxu0 0.0
    %205 = vmatprep.subr.mxu0 0.0
    %206 = vmatpush2.msra.mxu0 0.0
    %207 = vmatprep.subr.mxu0 0.0
    %208 = vmatpush2.msra.mxu0 0.0
    %209 = vmatprep.subr.mxu0 0.0
    %210 = vmatpush2.msra.mxu0 0.0
    %211 = vmatprep.subr.mxu0 0.0
    %212 = vmatpush2.msra.mxu0 0.0
    %213 = vmatprep.subr.mxu0 0.0
    %214 = vmatpush2.msra.mxu0 0.0
    %215 = vmatprep.mubr.f32.mxu0 0.0
    %v216 = vand.u32 %v49, 4294901760
    %217 = vmatmul.mubr.f32.gmra.mxu0 %v216
    %v218 = vpop.f32.mrf.mxu0
    %v219 = vadd.f32 %v128, %v218
    %v220 = vpop.f32.mrf.mxu0
    %221 = vmatprep.mubr.f32.mxu0 0.0
    %v222 = vand.u32 %v52, 4294901760
    %223 = vmatmul.mubr.f32.gmra.mxu0 %v222
    %v224 = vpop.f32.mrf.mxu0
    %v225 = vadd.f32 %v138, %v224
    %v226 = vpop.f32.mrf.mxu0
    %227 = vdwg.mxu0
    %228 = vmatprep.subr.mxu0 0.0
    %229 = vmatpush1.msra.mxu0 0.0
    %230 = vmatprep.subr.mxu0 0.0
    %231 = vmatpush1.msra.mxu0 0.0
    %232 = vmatprep.subr.mxu0 0.0
    %233 = vmatpush1.msra.mxu0 0.0
    %234 = vmatprep.subr.mxu0 0.0
    %235 = vmatpush1.msra.mxu0 0.0
    %236 = vmatprep.subr.mxu0 0.0
    %237 = vmatpush1.msra.mxu0 0.0
    %238 = vmatprep.subr.mxu0 0.0
    %239 = vmatpush1.msra.mxu0 0.0
    %240 = vmatprep.subr.mxu0 0.0
    %241 = vmatpush1.msra.mxu0 0.0
    %242 = vmatprep.subr.mxu0 0.0
    %243 = vmatpush1.msra.mxu0 0.0
    %244 = vmatprep.subr.mxu0 0.0
    %245 = vmatpush1.msra.mxu0 0.0
    %246 = vmatprep.subr.mxu0 0.0
    %247 = vmatpush1.msra.mxu0 0.0
    %248 = vmatprep.subr.mxu0 0.0
    %249 = vmatpush1.msra.mxu0 0.0
    %250 = vmatprep.subr.mxu0 0.0
    %251 = vmatpush1.msra.mxu0 0.0
    %252 = vmatprep.subr.mxu0 0.0
    %253 = vmatpush1.msra.mxu0 0.0
    %254 = vmatprep.subr.mxu0 0.0
    %255 = vmatpush1.msra.mxu0 0.0
    %256 = vmatprep.subr.mxu0 0.0
    %v257 = vand.u32 %v44, 4294901760
    %v258 = vsub.f32 %v44, %v257
    %259 = vmatpush1.msra.mxu0 %v258
    %260 = vmatprep.subr.mxu0 0.0
    %v261 = vand.u32 %v43, 4294901760
    %v262 = vsub.f32 %v43, %v261
    %263 = vmatpush1.msra.mxu0 %v262
    %264 = vmatprep.subr.mxu0 0.0
    %265 = vmatpush2.msra.mxu0 0.0
    %266 = vmatprep.subr.mxu0 0.0
    %267 = vmatpush2.msra.mxu0 0.0
    %268 = vmatprep.subr.mxu0 0.0
    %269 = vmatpush2.msra.mxu0 0.0
    %270 = vmatprep.subr.mxu0 0.0
    %271 = vmatpush2.msra.mxu0 0.0
    %272 = vmatprep.subr.mxu0 0.0
    %273 = vmatpush2.msra.mxu0 0.0
    %274 = vmatprep.subr.mxu0 0.0
    %275 = vmatpush2.msra.mxu0 0.0
    %276 = vmatprep.subr.mxu0 0.0
    %277 = vmatpush2.msra.mxu0 0.0
    %278 = vmatprep.subr.mxu0 0.0
    %279 = vmatpush2.msra.mxu0 0.0
    %280 = vmatprep.subr.mxu0 0.0
    %281 = vmatpush2.msra.mxu0 0.0
    %282 = vmatprep.subr.mxu0 0.0
    %283 = vmatpush2.msra.mxu0 0.0
    %284 = vmatprep.subr.mxu0 0.0
    %285 = vmatpush2.msra.mxu0 0.0
    %286 = vmatprep.subr.mxu0 0.0
    %287 = vmatpush2.msra.mxu0 0.0
    %288 = vmatprep.subr.mxu0 0.0
    %289 = vmatpush2.msra.mxu0 0.0
    %290 = vmatprep.subr.mxu0 0.0
    %291 = vmatpush2.msra.mxu0 0.0
    %292 = vmatprep.subr.mxu0 0.0
    %293 = vmatpush2.msra.mxu0 0.0
    %294 = vmatprep.subr.mxu0 0.0
    %295 = vmatpush2.msra.mxu0 0.0
    %296 = vmatprep.mubr.f32.mxu0 0.0
    %v297 = vand.u32 %v49, 4294901760
    %v298 = vsub.f32 %v49, %v297
    %299 = vmatmul.mubr.f32.gmra.mxu0 %v298
    %v300 = vpop.f32.mrf.mxu0
    %v301 = vadd.f32 %v219, %v300
    %v302 = vpop.f32.mrf.mxu0
    %303 = vmatprep.mubr.f32.mxu0 0.0
    %v304 = vand.u32 %v52, 4294901760
    %v305 = vsub.f32 %v52, %v304
    %306 = vmatmul.mubr.f32.gmra.mxu0 %v305
    %v307 = vpop.f32.mrf.mxu0
    %v308 = vadd.f32 %v225, %v307
    %v309 = vpop.f32.mrf.mxu0
    %310 = vdwg.mxu0
    %311 = vmatprep.subr.mxu0 0.0
    %312 = vmatpush1.msra.mxu0 0.0
    %313 = vmatprep.subr.mxu0 0.0
    %314 = vmatpush1.msra.mxu0 0.0
    %315 = vmatprep.subr.mxu0 0.0
    %316 = vmatpush1.msra.mxu0 0.0
    %317 = vmatprep.subr.mxu0 0.0
    %318 = vmatpush1.msra.mxu0 0.0
    %319 = vmatprep.subr.mxu0 0.0
    %320 = vmatpush1.msra.mxu0 0.0
    %321 = vmatprep.subr.mxu0 0.0
    %322 = vmatpush1.msra.mxu0 0.0
    %323 = vmatprep.subr.mxu0 0.0
    %324 = vmatpush1.msra.mxu0 0.0
    %325 = vmatprep.subr.mxu0 0.0
    %326 = vmatpush1.msra.mxu0 0.0
    %327 = vmatprep.subr.mxu0 0.0
    %328 = vmatpush1.msra.mxu0 0.0
    %329 = vmatprep.subr.mxu0 0.0
    %330 = vmatpush1.msra.mxu0 0.0
    %331 = vmatprep.subr.mxu0 0.0
    %332 = vmatpush1.msra.mxu0 0.0
    %333 = vmatprep.subr.mxu0 0.0
    %334 = vmatpush1.msra.mxu0 0.0
    %335 = vmatprep.subr.mxu0 0.0
    %336 = vmatpush1.msra.mxu0 0.0
    %337 = vmatprep.subr.mxu0 0.0
    %338 = vmatpush1.msra.mxu0 0.0
    %339 = vmatprep.subr.mxu0 0.0
    %v340 = vand.u32 %v44, 4294901760
    %341 = vmatpush1.msra.mxu0 %v340
    %342 = vmatprep.subr.mxu0 0.0
    %v343 = vand.u32 %v43, 4294901760
    %344 = vmatpush1.msra.mxu0 %v343
    %345 = vmatprep.subr.mxu0 0.0
    %346 = vmatpush2.msra.mxu0 0.0
    %347 = vmatprep.subr.mxu0 0.0
    %348 = vmatpush2.msra.mxu0 0.0
    %349 = vmatprep.subr.mxu0 0.0
    %350 = vmatpush2.msra.mxu0 0.0
    %351 = vmatprep.subr.mxu0 0.0
    %352 = vmatpush2.msra.mxu0 0.0
    %353 = vmatprep.subr.mxu0 0.0
    %354 = vmatpush2.msra.mxu0 0.0
    %355 = vmatprep.subr.mxu0 0.0
    %356 = vmatpush2.msra.mxu0 0.0
    %357 = vmatprep.subr.mxu0 0.0
    %358 = vmatpush2.msra.mxu0 0.0
    %359 = vmatprep.subr.mxu0 0.0
    %360 = vmatpush2.msra.mxu0 0.0
    %361 = vmatprep.subr.mxu0 0.0
    %362 = vmatpush2.msra.mxu0 0.0
    %363 = vmatprep.subr.mxu0 0.0
    %364 = vmatpush2.msra.mxu0 0.0
    %365 = vmatprep.subr.mxu0 0.0
    %366 = vmatpush2.msra.mxu0 0.0
    %367 = vmatprep.subr.mxu0 0.0
    %368 = vmatpush2.msra.mxu0 0.0
    %369 = vmatprep.subr.mxu0 0.0
    %370 = vmatpush2.msra.mxu0 0.0
    %371 = vmatprep.subr.mxu0 0.0
    %372 = vmatpush2.msra.mxu0 0.0
    %373 = vmatprep.subr.mxu0 0.0
    %374 = vmatpush2.msra.mxu0 0.0
    %375 = vmatprep.subr.mxu0 0.0
    %376 = vmatpush2.msra.mxu0 0.0
    %377 = vmatprep.mubr.f32.mxu0 0.0
    %v378 = vand.u32 %v49, 4294901760
    %v379 = vsub.f32 %v49, %v378
    %v380 = vand.u32 %v379, 4294901760
    %381 = vmatmul.mubr.f32.gmra.mxu0 %v380
    %v382 = vpop.f32.mrf.mxu0
    %v383 = vadd.f32 %v301, %v382
    %v384 = vpop.f32.mrf.mxu0
    %385 = vmatprep.mubr.f32.mxu0 0.0
    %v386 = vand.u32 %v52, 4294901760
    %v387 = vsub.f32 %v52, %v386
    %v388 = vand.u32 %v387, 4294901760
    %389 = vmatmul.mubr.f32.gmra.mxu0 %v388
    %v390 = vpop.f32.mrf.mxu0
    %v391 = vadd.f32 %v308, %v390
    %v392 = vpop.f32.mrf.mxu0
    %393 = vdwg.mxu0
    %394 = vmatprep.subr.mxu0 0.0
    %395 = vmatpush1.msra.mxu0 0.0
    %396 = vmatprep.subr.mxu0 0.0
    %397 = vmatpush1.msra.mxu0 0.0
    %398 = vmatprep.subr.mxu0 0.0
    %399 = vmatpush1.msra.mxu0 0.0
    %400 = vmatprep.subr.mxu0 0.0
    %401 = vmatpush1.msra.mxu0 0.0
    %402 = vmatprep.subr.mxu0 0.0
    %403 = vmatpush1.msra.mxu0 0.0
    %404 = vmatprep.subr.mxu0 0.0
    %405 = vmatpush1.msra.mxu0 0.0
    %406 = vmatprep.subr.mxu0 0.0
    %407 = vmatpush1.msra.mxu0 0.0
    %408 = vmatprep.subr.mxu0 0.0
    %409 = vmatpush1.msra.mxu0 0.0
    %410 = vmatprep.subr.mxu0 0.0
    %411 = vmatpush1.msra.mxu0 0.0
    %412 = vmatprep.subr.mxu0 0.0
    %413 = vmatpush1.msra.mxu0 0.0
    %414 = vmatprep.subr.mxu0 0.0
    %415 = vmatpush1.msra.mxu0 0.0
    %416 = vmatprep.subr.mxu0 0.0
    %417 = vmatpush1.msra.mxu0 0.0
    %418 = vmatprep.subr.mxu0 0.0
    %419 = vmatpush1.msra.mxu0 0.0
    %420 = vmatprep.subr.mxu0 0.0
    %421 = vmatpush1.msra.mxu0 0.0
    %422 = vmatprep.subr.mxu0 0.0
    %v423 = vand.u32 %v44, 4294901760
    %v424 = vsub.f32 %v44, %v423
    %v425 = vand.u32 %v424, 4294901760
    %426 = vmatpush1.msra.mxu0 %v425
    %427 = vmatprep.subr.mxu0 0.0
    %v428 = vand.u32 %v43, 4294901760
    %v429 = vsub.f32 %v43, %v428
    %v430 = vand.u32 %v429, 4294901760
    %431 = vmatpush1.msra.mxu0 %v430
    %432 = vmatprep.subr.mxu0 0.0
    %433 = vmatpush2.msra.mxu0 0.0
    %434 = vmatprep.subr.mxu0 0.0
    %435 = vmatpush2.msra.mxu0 0.0
    %436 = vmatprep.subr.mxu0 0.0
    %437 = vmatpush2.msra.mxu0 0.0
    %438 = vmatprep.subr.mxu0 0.0
    %439 = vmatpush2.msra.mxu0 0.0
    %440 = vmatprep.subr.mxu0 0.0
    %441 = vmatpush2.msra.mxu0 0.0
    %442 = vmatprep.subr.mxu0 0.0
    %443 = vmatpush2.msra.mxu0 0.0
    %444 = vmatprep.subr.mxu0 0.0
    %445 = vmatpush2.msra.mxu0 0.0
    %446 = vmatprep.subr.mxu0 0.0
    %447 = vmatpush2.msra.mxu0 0.0
    %448 = vmatprep.subr.mxu0 0.0
    %449 = vmatpush2.msra.mxu0 0.0
    %450 = vmatprep.subr.mxu0 0.0
    %451 = vmatpush2.msra.mxu0 0.0
    %452 = vmatprep.subr.mxu0 0.0
    %453 = vmatpush2.msra.mxu0 0.0
    %454 = vmatprep.subr.mxu0 0.0
    %455 = vmatpush2.msra.mxu0 0.0
    %456 = vmatprep.subr.mxu0 0.0
    %457 = vmatpush2.msra.mxu0 0.0
    %458 = vmatprep.subr.mxu0 0.0
    %459 = vmatpush2.msra.mxu0 0.0
    %460 = vmatprep.subr.mxu0 0.0
    %461 = vmatpush2.msra.mxu0 0.0
    %462 = vmatprep.subr.mxu0 0.0
    %463 = vmatpush2.msra.mxu0 0.0
    %464 = vmatprep.mubr.f32.mxu0 0.0
    %v465 = vand.u32 %v49, 4294901760
    %466 = vmatmul.mubr.f32.gmra.mxu0 %v465
    %v467 = vpop.f32.mrf.mxu0
    %v468 = vadd.f32 %v383, %v467
    %v469 = vpop.f32.mrf.mxu0
    %470 = vmatprep.mubr.f32.mxu0 0.0
    %v471 = vand.u32 %v52, 4294901760
    %472 = vmatmul.mubr.f32.gmra.mxu0 %v471
    %v473 = vpop.f32.mrf.mxu0
    %v474 = vadd.f32 %v391, %v473
    %v475 = vpop.f32.mrf.mxu0
    %476 = vdwg.mxu0
    %477 = vmatprep.subr.mxu0 0.0
    %478 = vmatpush1.msra.mxu0 0.0
    %479 = vmatprep.subr.mxu0 0.0
    %480 = vmatpush1.msra.mxu0 0.0
    %481 = vmatprep.subr.mxu0 0.0
    %482 = vmatpush1.msra.mxu0 0.0
    %483 = vmatprep.subr.mxu0 0.0
    %484 = vmatpush1.msra.mxu0 0.0
    %485 = vmatprep.subr.mxu0 0.0
    %486 = vmatpush1.msra.mxu0 0.0
    %487 = vmatprep.subr.mxu0 0.0
    %488 = vmatpush1.msra.mxu0 0.0
    %489 = vmatprep.subr.mxu0 0.0
    %490 = vmatpush1.msra.mxu0 0.0
    %491 = vmatprep.subr.mxu0 0.0
    %492 = vmatpush1.msra.mxu0 0.0
    %493 = vmatprep.subr.mxu0 0.0
    %494 = vmatpush1.msra.mxu0 0.0
    %495 = vmatprep.subr.mxu0 0.0
    %496 = vmatpush1.msra.mxu0 0.0
    %497 = vmatprep.subr.mxu0 0.0
    %498 = vmatpush1.msra.mxu0 0.0
    %499 = vmatprep.subr.mxu0 0.0
    %500 = vmatpush1.msra.mxu0 0.0
    %501 = vmatprep.subr.mxu0 0.0
    %502 = vmatpush1.msra.mxu0 0.0
    %503 = vmatprep.subr.mxu0 0.0
    %504 = vmatpush1.msra.mxu0 0.0
    %505 = vmatprep.subr.mxu0 0.0
    %v506 = vand.u32 %v44, 4294901760
    %507 = vmatpush1.msra.mxu0 %v506
    %508 = vmatprep.subr.mxu0 0.0
    %v509 = vand.u32 %v43, 4294901760
    %510 = vmatpush1.msra.mxu0 %v509
    %511 = vmatprep.subr.mxu0 0.0
    %512 = vmatpush2.msra.mxu0 0.0
    %513 = vmatprep.subr.mxu0 0.0
    %514 = vmatpush2.msra.mxu0 0.0
    %515 = vmatprep.subr.mxu0 0.0
    %516 = vmatpush2.msra.mxu0 0.0
    %517 = vmatprep.subr.mxu0 0.0
    %518 = vmatpush2.msra.mxu0 0.0
    %519 = vmatprep.subr.mxu0 0.0
    %520 = vmatpush2.msra.mxu0 0.0
    %521 = vmatprep.subr.mxu0 0.0
    %522 = vmatpush2.msra.mxu0 0.0
    %523 = vmatprep.subr.mxu0 0.0
    %524 = vmatpush2.msra.mxu0 0.0
    %525 = vmatprep.subr.mxu0 0.0
    %526 = vmatpush2.msra.mxu0 0.0
    %527 = vmatprep.subr.mxu0 0.0
    %528 = vmatpush2.msra.mxu0 0.0
    %529 = vmatprep.subr.mxu0 0.0
    %530 = vmatpush2.msra.mxu0 0.0
    %531 = vmatprep.subr.mxu0 0.0
    %532 = vmatpush2.msra.mxu0 0.0
    %533 = vmatprep.subr.mxu0 0.0
    %534 = vmatpush2.msra.mxu0 0.0
    %535 = vmatprep.subr.mxu0 0.0
    %536 = vmatpush2.msra.mxu0 0.0
    %537 = vmatprep.subr.mxu0 0.0
    %538 = vmatpush2.msra.mxu0 0.0
    %539 = vmatprep.subr.mxu0 0.0
    %540 = vmatpush2.msra.mxu0 0.0
    %541 = vmatprep.subr.mxu0 0.0
    %542 = vmatpush2.msra.mxu0 0.0
    %543 = vmatprep.mubr.f32.mxu0 0.0
    %v544 = vand.u32 %v49, 4294901760
    %545 = vmatmul.mubr.f32.gmra.mxu0 %v544
    %v546 = vpop.f32.mrf.mxu0
    %v547 = vadd.f32 %v468, %v546
    %v548 = vpop.f32.mrf.mxu0
    %549 = vmatprep.mubr.f32.mxu0 0.0
    %v550 = vand.u32 %v52, 4294901760
    %551 = vmatmul.mubr.f32.gmra.mxu0 %v550
    %v552 = vpop.f32.mrf.mxu0
    %v553 = vadd.f32 %v474, %v552
    %v554 = vpop.f32.mrf.mxu0
    %555 = vdwg.mxu0
    %v556 = vsub.f32 %v43, %v547
    %v557 = vsub.f32 %v44, %v553
    %558 = vst [vmem:[#allocation7] sm:$0xff] %v547
    %559 = vst [vmem:[#allocation7 + $0x8] sm:$0xff] %v553
    %560 = vst [vmem:[#allocation8] sm:$0xff] %v556
    %561 = vst [vmem:[#allocation8 + $0x8] sm:$0xff] %v557
    // Predicated region
    $region18: #{tpu_custom_call.1} parent=1 // pred_check
      _
    $region19: #{tpu_custom_call.1} parent=1 // pred_check_branch
      %563 = sbr.rel (0) target = $region21
    $region20: #{tpu_custom_call.1} parent=1 // pred_region
      %s565 = ssub.s32 256, 256
      %566 = vsyncadd [#allocation4], %s565
      %s567 = sshll.u32 [#allocation7], 4
      %s568 = int_to_ptr.vmem [resolvable:$true] %s567
      %573 = dma.vmem_to_hbm [thread:$0]  %s568, 256, %s2, [#allocation4], 128, 128, 8
    $region21: #{tpu_custom_call.1} parent=1 // pred_fallthru
      _
    // Predicated region
    $region22: #{tpu_custom_call.1} parent=1 // pred_check
      _
    $region23: #{tpu_custom_call.1} parent=1 // pred_check_branch
      %575 = sbr.rel (0) target = $region25
    $region24: #{tpu_custom_call.1} parent=1 // pred_region
      %s577 = ssub.s32 256, 256
      %578 = vsyncadd [#allocation9], %s577
      %s579 = sshll.u32 [#allocation8], 4
      %s580 = int_to_ptr.vmem [resolvable:$true] %s579
      %585 = dma.vmem_to_hbm [thread:$0]  %s580, 256, %s3, [#allocation9], 128, 128, 8
    $region25: #{tpu_custom_call.1} parent=1 // pred_fallthru
      _
    // Predicated region
    $region26: #{tpu_custom_call.1} parent=1 // pred_check
      _
    $region27: #{tpu_custom_call.1} parent=1 // pred_check_branch
      %587 = sbr.rel (0) target = $region29
    $region28: #{tpu_custom_call.1} parent=1 // pred_region
      %588 = dma.done [#allocation4], 256
    $region29: #{tpu_custom_call.1} parent=1 // pred_fallthru
      _
    // Predicated region
    $region30: #{tpu_custom_call.1} parent=1 // pred_check
      _
    $region31: #{tpu_custom_call.1} parent=1 // pred_check_branch
      %590 = sbr.rel (0) target = $region33
    $region32: #{tpu_custom_call.1} parent=1 // pred_region
      %591 = dma.done [#allocation9], 256
    $region33: #{tpu_custom_call.1} parent=1 // pred_fallthru
      _
    %592 = vsyncpa [#allocation3], 1
    %593 = vsyncpa [#allocation6], 1
    %594 = vsyncpa [#allocation4], 1
    %595 = vsyncpa [#allocation9], 1

</llo_original>
